<compile_context>
chip_gen: v7x
topology: tpu7x:2x2x1
jax: 0.10.0
libtpu: 0.0.40
codegen_flags: <defaults>
</compile_context>

<pallas_src>
import functools
import math

import jax
import jax.numpy as jnp
from jax.experimental import pallas as pl
from jax.experimental.pallas import tpu as pltpu

# Folded constants: sqrt(2/pi) and 0.044715*sqrt(2/pi)
_C1 = math.sqrt(2.0 / math.pi)
_C2 = 0.044715 * math.sqrt(2.0 / math.pi)


def _chip_flags():
    """(has_bf16_vpu, has_two_tensorcores) from the local device kind.

    Conservative fallbacks (f32 compute, single-TC tiling) are always
    functionally correct.
    """
    try:
        kind = jax.devices()[0].device_kind.lower()
    except Exception:
        return False, False
    has_bf16_vpu = ("v6" in kind) or ("v7" in kind)   # v5e has no bf16 VPU/EUP
    has_two_tc = "v7" in kind                          # v5e/v6e = 1 TC per chip
    return has_bf16_vpu, has_two_tc


_HAS_BF16_VPU, _HAS_MEGACORE = _chip_flags()


def _sublane_multiple(dtype):
    itemsize = jnp.dtype(dtype).itemsize
    if itemsize >= 4:
        return 8
    if itemsize == 2:
        return 16
    return 32


def _pick_compute_dtype(dtype):
    d = jnp.dtype(dtype)
    # bf16-in-bf16 only where the VPU/EUP support it; f16 stays in f32 to
    # avoid losing its extra mantissa bits through a bf16 intermediate.
    if _HAS_BF16_VPU and d == jnp.dtype(jnp.bfloat16):
        return jnp.bfloat16
    return jnp.float32


def _gelu_kernel(x_ref, o_ref, *, compute_dtype):
    # GPT2 formula: 0.5*x*(1 + tanh(sqrt(2/pi)*(x + 0.044715*x^3)))
    #   == half_x + half_x * tanh(x * (C1 + C2*(x*x)))
    # Horner form, constants pre-folded: 5 mul + 2 add on the VPU, tanh on the
    # EUP (separate bundle slot).  Casts are no-ops when compute_dtype matches
    # the stored dtype (bf16-native path on v6e/v7x).
    x = x_ref[...].astype(compute_dtype)
    half_x = 0.5 * x
    inner = x * (_C1 + _C2 * (x * x))
    y = half_x + half_x * jnp.tanh(inner)
    o_ref[...] = y.astype(o_ref.dtype)


def _run_2d(x2, *, target_bytes=2 * 1024 * 1024):
    """Run the GeLU kernel on a 2-D (rows, feat) slab."""
    rows, feat = x2.shape
    dtype = x2.dtype
    itemsize = jnp.dtype(dtype).itemsize
    sub = _sublane_multiple(dtype)
    compute_dtype = _pick_compute_dtype(dtype)

    # ---- lane (feature) blocking: keep lane-dense multiples of 128 and cap
    #      the lane width so a minimal-row block stays near the byte target
    #      (protects v7x's smaller VMEM for very wide activations).
    tile_f = feat
    if feat % 128 == 0:
        max_tile_f = max(128, (target_bytes // (sub * itemsize)) // 128 * 128)
        if feat > max_tile_f:
            tile_f = max_tile_f
    grid_f = pl.cdiv(feat, tile_f)

    # ---- row (sublane) blocking: size the block by bytes (~2 MiB), rounded
    #      to the dtype's packed sublane multiple.  Ragged last block is
    #      handled by Pallas (padded reads, masked writes).
    if rows <= sub:
        tile_r = rows
    else:
        tile_r = max(sub, (target_bytes // (tile_f * itemsize)) // sub * sub)
        if tile_r >= rows:
            tile_r = rows  # full extent: always a legal block dim
    grid_r = pl.cdiv(rows, tile_r)

    # v7x megacore only (2 TCs): make sure both TensorCores get work, as long
    # as each block stays above a ~2 MiB floor (below that, per-step overhead
    # and DMA issue latency start to show).  v5e/v6e run the grid as a
    # sequential loop, so no splitting there.
    if _HAS_MEGACORE:
        floor_bytes = 2 << 20
        while (grid_r * grid_f < 4 and tile_r > sub
               and tile_r * tile_f * itemsize > floor_bytes):
            tile_r = max(sub, (tile_r // 2) // sub * sub)
            grid_r = pl.cdiv(rows, tile_r)

    kernel = functools.partial(_gelu_kernel, compute_dtype=compute_dtype)
    return pl.pallas_call(
        kernel,
        out_shape=jax.ShapeDtypeStruct((rows, feat), dtype),
        grid=(grid_r, grid_f),
        in_specs=[pl.BlockSpec((tile_r, tile_f), lambda i, j: (i, j))],
        out_specs=pl.BlockSpec((tile_r, tile_f), lambda i, j: (i, j)),
        compiler_params=pltpu.CompilerParams(
            dimension_semantics=("parallel", "parallel"),
        ),
    )(x2)


def gelu(x):
    """Tanh-approx (GPT2) GeLU. Accepts any shape; elementwise."""
    orig_shape = x.shape
    n = x.size
    if n == 0:
        return x

    # Case 1: last axis is already lane-dense (GPT2 hidden sizes 768/3072 etc.)
    if x.ndim >= 1 and orig_shape[-1] % 128 == 0:
        out = _run_2d(x.reshape(-1, orig_shape[-1]))
        return out.reshape(orig_shape)

    # Case 2: re-slab the contiguous tensor into a lane-dense 2-D view.
    # Metadata-only reshape for default layouts; GeLU is elementwise so the
    # layout does not matter semantically.
    if n % 128 == 0:
        lane = 128
        for cand in (4096, 2048, 1024, 512, 256, 128):
            if n % cand == 0:
                lane = cand
                break
        out = _run_2d(x.reshape(-1, lane))
        return out.reshape(orig_shape)

    # Case 3: odd total element count — pad the flattened tail to a multiple
    # of 128 (one extra pass, unavoidable) and slice it back off. GeLU(0)=0.
    lane = 128
    pad = (-n) % lane
    xf = jnp.pad(x.reshape(-1), (0, pad))
    out = _run_2d(xf.reshape(-1, lane))
    return out.reshape(-1)[:n].reshape(orig_shape)


def _gelu_ref(x):
    c = math.sqrt(2.0 / math.pi)
    return 0.5 * x * (1.0 + jnp.tanh(c * (x + 0.044715 * x ** 3)))


if __name__ == "__main__":
    key = jax.random.PRNGKey(0)

    # Small GPT2-style activation: (batch=2, seq=8, hidden=32) -> re-slab path.
    x = jax.random.normal(key, (2, 8, 32), dtype=jnp.float32)
    y = jax.block_until_ready(gelu(x))
    assert y.shape == x.shape and y.dtype == x.dtype
    assert jnp.allclose(y, _gelu_ref(x), atol=1e-5, rtol=1e-5), "mismatch (2,8,32) f32"

    # Lane-dense hidden (multiple of 128) path, f32.
    x2 = jax.random.normal(jax.random.PRNGKey(1), (2, 8, 256), dtype=jnp.float32)
    y2 = jax.block_until_ready(gelu(x2))
    assert jnp.allclose(y2, _gelu_ref(x2), atol=1e-5, rtol=1e-5), "mismatch (2,8,256) f32"

    # bf16 path (bf16-native compute on v6e/v7x, f32-internal on v5e).
    x3 = jax.random.normal(jax.random.PRNGKey(2), (2, 8, 256), dtype=jnp.bfloat16)
    y3 = jax.block_until_ready(gelu(x3))
    ref3 = _gelu_ref(x3.astype(jnp.float32))
    assert y3.dtype == jnp.bfloat16
    assert jnp.allclose(y3.astype(jnp.float32), ref3, atol=6e-2, rtol=6e-2), "mismatch bf16"

    # Odd-size fallback path.
    x4 = jax.random.normal(jax.random.PRNGKey(3), (3, 5, 7), dtype=jnp.float32)
    y4 = jax.block_until_ready(gelu(x4))
    assert jnp.allclose(y4, _gelu_ref(x4), atol=1e-5, rtol=1e-5), "mismatch (3,5,7)"

    print("KERNEL_OK")
</pallas_src>

<mosaic_0001>
module attributes {stable_mosaic.version = 11 : i64} {
  func.func @_gelu_kernel(%arg0: i32, %arg1: i32, %arg2: memref<1x512xf32, #tpu.memory_space<vmem>>, %arg3: memref<1x512xf32, #tpu.memory_space<vmem>>) attributes {dimension_semantics = [#tpu.dimension_semantics<parallel>, #tpu.dimension_semantics<parallel>], iteration_bounds = array<i64: 1, 1>, scalar_prefetch = 0 : i64, scratch_operands = 0 : i64, tpu.core_type = #tpu.core_type<tc>, window_params = [{transform_indices = @transform_0, window_bounds = array<i64: 1, 512>}, {transform_indices = @transform_1, window_bounds = array<i64: 1, 512>}]} {
    %c0 = arith.constant 0 : index
    %c0_0 = arith.constant 0 : index
    %0 = vector.load %arg2[%c0, %c0_0] : memref<1x512xf32, #tpu.memory_space<vmem>>, vector<1x512xf32>
    %cst = arith.constant 5.000000e-01 : f32
    %1 = vector.broadcast %cst : f32 to vector<1x512xf32>
    %2 = arith.mulf %1, %0 : vector<1x512xf32>
    %3 = arith.mulf %0, %0 : vector<1x512xf32>
    %cst_1 = arith.constant 0.0356774069 : f32
    %4 = vector.broadcast %cst_1 : f32 to vector<1x512xf32>
    %5 = arith.mulf %4, %3 : vector<1x512xf32>
    %cst_2 = arith.constant 0.797884583 : f32
    %6 = vector.broadcast %cst_2 : f32 to vector<1x512xf32>
    %7 = arith.addf %6, %5 : vector<1x512xf32>
    %8 = arith.mulf %0, %7 : vector<1x512xf32>
    %9 = math.tanh %8 : vector<1x512xf32>
    %10 = arith.mulf %2, %9 : vector<1x512xf32>
    %11 = arith.addf %2, %10 : vector<1x512xf32>
    %c0_3 = arith.constant 0 : index
    %c0_4 = arith.constant 0 : index
    %12 = vector.load %arg3[%c0_3, %c0_4] : memref<1x512xf32, #tpu.memory_space<vmem>>, vector<1x512xf32>
    tpu.vector_store %arg3[%c0_3, %c0_4], %11 {strides = array<i32>} : memref<1x512xf32, #tpu.memory_space<vmem>>, vector<1x512xf32>,
    return
  }
  func.func @transform_0(%arg0: i32, %arg1: i32) -> (i32, i32) {
    %c0_i32 = arith.constant 0 : i32
    return %arg0, %arg1 : i32, i32
  }
  func.func @transform_1(%arg0: i32, %arg1: i32) -> (i32, i32) {
    %c0_i32 = arith.constant 0 : i32
    return %arg0, %arg1 : i32, i32
  }
}

</mosaic_0001>

<llo_original>
// kernel: tpu_custom_call.1
$region0: #{tpu_custom_call.1}
  #allocation0 [shape = 'u32[]', space=smem, size = 0x4, offset = 0x4, fixed_abs, tag = 'smem constant byte address 0x4 - core index']
  #allocation1 [shape = 'u32[144,128]{1,0:T(1,128)}', space=vmem, size = 0x12000, scoped, tag = 'internal scratch']
  %s0 = inlined_call_operand.hbm [shape: f32[1,512], index: 0, kind: input, shape index: {}]
  %s1 = inlined_call_operand.hbm [shape: f32[1,512], index: 1, kind: output, shape index: {}]
  %s2 = sld [smem:[#allocation0]]
  $region18: #{tpu_custom_call.1} parent=0
    _
  %s4 = ssub.s32 1, %s2
  %s5 = scalar_select 0, %s4, %s2
  $region1: #{tpu_custom_call.1} parent=0
    #allocation2 [shape = 'u8[2048]{0}', space=vmem, size = 0x800, scoped, tag = 'input window, operand 0, single buffered']
    #allocation3 [shape = 's32[1]{0}', space=sflag, size = 0x4, scoped, tag = 'scoped memory for tpu_custom_call.1']
    #allocation4 [shape = 's32[1]{0}', space=sflag, size = 0x4, scoped, tag = 'scoped memory for tpu_custom_call.1']
    #allocation5 [shape = 'u8[2048]{0}', space=vmem, size = 0x800, scoped, tag = 'output window, operand 0, single buffered']
    %6 = vsyncpa [#allocation3], 0
    %7 = vsyncpa [#allocation4], 0
    // Predicated region
    $region2: #{tpu_custom_call.1} parent=1 // pred_check
      _
    $region3: #{tpu_custom_call.1} parent=1 // pred_check_branch
      %9 = sbr.rel (0) target = $region5
    $region4: #{tpu_custom_call.1} parent=1 // pred_region
      %s11 = ssub.s32 64, 64
      %12 = vsyncadd [#allocation3], %s11
      %s14 = sshll.u32 [#allocation2], 4
      %s15 = int_to_ptr.vmem [resolvable:$true] %s14
      %17 = dma.hbm_to_vmem [thread:$0]  %s0, 64, %s15, [#allocation3]
    $region5: #{tpu_custom_call.1} parent=1 // pred_fallthru
      _
    // Predicated region
    $region6: #{tpu_custom_call.1} parent=1 // pred_check
      _
    $region7: #{tpu_custom_call.1} parent=1 // pred_check_branch
      %19 = sbr.rel (0) target = $region9
    $region8: #{tpu_custom_call.1} parent=1 // pred_region
      %20 = dma.done [#allocation3], 64
    $region9: #{tpu_custom_call.1} parent=1 // pred_fallthru
      _
    %v21 = vld [vmem:[#allocation2] sm:$0xf]
    %v22 = vmul.f32 %v21, 0.5
    %v23 = vmul.f32 %v21, %v21
    %v24 = vmul.f32 %v23, 0.035677407
    %v25 = vadd.f32 %v24, 0.7978846
    %v26 = vmul.f32 %v21, %v25
    %v27 = vtanh.pop %v26
    %v28 = vmul.f32 %v22, %v27
    %v29 = vadd.f32 %v22, %v28
    %v30 = vlaneseq
    %vm31 = vcmp.ge.s32.totalorder %v30, 0
    %vm32 = vcmp.lt.s32.totalorder %v30, 512
    %vm33 = vmand %vm31, %vm32
    %34 = vst.msk [vmem:[#allocation5] sm:$0xf] %vm33, %v29
    // Predicated region
    $region10: #{tpu_custom_call.1} parent=1 // pred_check
      _
    $region11: #{tpu_custom_call.1} parent=1 // pred_check_branch
      %36 = sbr.rel (0) target = $region13
    $region12: #{tpu_custom_call.1} parent=1 // pred_region
      %s38 = ssub.s32 64, 64
      %39 = vsyncadd [#allocation4], %s38
      %s41 = sshll.u32 [#allocation5], 4
      %s42 = int_to_ptr.vmem [resolvable:$true] %s41
      %44 = dma.vmem_to_hbm [thread:$0]  %s42, 64, %s1, [#allocation4]
    $region13: #{tpu_custom_call.1} parent=1 // pred_fallthru
      _
    // Predicated region
    $region14: #{tpu_custom_call.1} parent=1 // pred_check
      _
    $region15: #{tpu_custom_call.1} parent=1 // pred_check_branch
      %46 = sbr.rel (0) target = $region17
    $region16: #{tpu_custom_call.1} parent=1 // pred_region
      %47 = dma.done [#allocation4], 64
    $region17: #{tpu_custom_call.1} parent=1 // pred_fallthru
      _
    %48 = vsyncpa [#allocation3], 1
    %49 = vsyncpa [#allocation4], 1

</llo_original>
